<compile_context>
chip_gen: v6e
topology: v6e:2x2x1
jax: 0.10.0
libtpu: 0.0.40
codegen_flags: <defaults>
</compile_context>

<pallas_src>
import jax
import jax.numpy as jnp
from jax.experimental import pallas as pl
from jax.experimental.pallas import tpu as pltpu

INPUT_SIZE = 400          # forced by the hard-coded x[:, :200] / x[:, 200:] split
HALF = INPUT_SIZE // 2    # 200
PADDED_HALF = 256         # lane-pad 200 -> 256 (multiple of 128) for clean vreg tiling
PADDED_FEAT = 2 * PADDED_HALF
BN_EPS = 1e-5
ROW_BLOCK = 16            # rows per in-register block inside the fused kernel


def _bn_stats_kernel(nrows_ref, x_ref, sum_ref, sq_ref):
    """Accumulate per-feature sum(x) and sum(x*x) over the batch grid axis."""
    @pl.when(pl.program_id(0) == 0)
    def _():
        sum_ref[...] = jnp.zeros_like(sum_ref)
        sq_ref[...] = jnp.zeros_like(sq_ref)

    tile_rows = x_ref.shape[0]
    row0 = pl.program_id(0) * tile_rows
    rows = jax.lax.broadcasted_iota(jnp.int32, x_ref.shape, 0) + row0
    x = jnp.where(rows < nrows_ref[0], x_ref[...], 0.0)    # mask grid-padding rows
    sum_ref[...] += jnp.sum(x, axis=0, keepdims=True)
    sq_ref[...] += jnp.sum(x * x, axis=0, keepdims=True)


def _nn_fused_kernel(x_ref, scale_ref, shift_ref, w2t_ref, w1_ref, b1_ref, b2_ref, o_ref):
    # VMEM: x (TILE_N, 512), scale/shift (1, 512), w2t (H, 256), o (TILE_N, 1)
    # SMEM: w1 (H, 2), b1 (1, H), b2 (1, 1)
    n_hidden = w2t_ref.shape[0]
    tile_rows = x_ref.shape[0]
    n_blocks = tile_rows // ROW_BLOCK

    # Folded BN affine (per feature), loaded once per grid step.
    scale_o = scale_ref[:, :PADDED_HALF]
    scale_n = scale_ref[:, PADDED_HALF:]
    shift_o = shift_ref[:, :PADDED_HALF]
    shift_n = shift_ref[:, PADDED_HALF:]

    # Hoist tiny SMEM scalar reads out of the row-block loop.
    a = [w1_ref[k, 0] for k in range(n_hidden)]
    c = [w1_ref[k, 1] for k in range(n_hidden)]
    d = [b1_ref[0, k] for k in range(n_hidden)]
    bias2 = b2_ref[0, 0]

    @pl.loop(0, n_blocks)
    def _(r):
        r0 = pl.multiple_of(r * ROW_BLOCK, ROW_BLOCK)
        xblk = x_ref[pl.ds(r0, ROW_BLOCK), :]                       # (R, 512)
        orig = xblk[:, :PADDED_HALF] * scale_o + shift_o             # (R, 256) BN'd first half
        new = xblk[:, PADDED_HALF:] * scale_n + shift_n              # (R, 256) BN'd second half
        acc = jnp.zeros_like(orig)
        for k in range(n_hidden):                                    # small H -> full unroll
            h_k = jnp.maximum(orig * a[k] + new * c[k] + d[k], 0.0)  # fc1 unit k + ReLU
            acc = acc + h_k * w2t_ref[k:k + 1, :]                    # fc2 row (pad lanes == 0)
        logits = jnp.sum(acc, axis=1, keepdims=True) + bias2         # (R, 1), lane reduce (XLU)
        o_ref[pl.ds(r0, ROW_BLOCK), :] = jax.nn.sigmoid(logits)


def _round_up(v, m):
    return (v + m - 1) // m * m


def nn_forward(x, gamma, beta, w1, b1, w2, b2, hidden_dim, *, tile_n=1024):
    N, F = x.shape
    assert F == INPUT_SIZE, "the module's forward hard-codes a split at column 200"
    H = hidden_dim
    x = x.astype(jnp.float32)
    pad = PADDED_HALF - HALF

    # ---- wrapper-side layout plumbing (cheap XLA work) ----
    # Lane-pad each half to 256 and concatenate -> (N, 512); pad lanes are exactly zero.
    x_p = jnp.concatenate(
        [jnp.pad(x[:, :HALF], ((0, 0), (0, pad))),
         jnp.pad(x[:, HALF:], ((0, 0), (0, pad)))], axis=1)

    gamma_p = jnp.concatenate(
        [jnp.pad(gamma[:HALF].astype(jnp.float32), (0, pad)),
         jnp.pad(gamma[HALF:].astype(jnp.float32), (0, pad))]).reshape(1, PADDED_FEAT)
    beta_p = jnp.concatenate(
        [jnp.pad(beta[:HALF].astype(jnp.float32), (0, pad)),
         jnp.pad(beta[HALF:].astype(jnp.float32), (0, pad))]).reshape(1, PADDED_FEAT)

    # fc2 weights transposed: row k = weights of hidden unit k over the 200 pair-features.
    # Pad lanes MUST be zero so the final lane reduction ignores them.
    w2t = jnp.pad(w2.reshape(HALF, H).T.astype(jnp.float32), ((0, 0), (0, pad)))  # (H, 256)
    w1_s = w1.astype(jnp.float32)                     # (H, 2)  -> SMEM
    b1_s = b1.reshape(1, H).astype(jnp.float32)       # (1, H)  -> SMEM
    b2_s = b2.reshape(1, 1).astype(jnp.float32)       # (1, 1)  -> SMEM

    tile_n = max(ROW_BLOCK, min(_round_up(tile_n, ROW_BLOCK), _round_up(N, ROW_BLOCK)))
    grid = (pl.cdiv(N, tile_n),)
    nrows = jnp.array([N], jnp.int32)
    smem = pl.BlockSpec(memory_space=pltpu.MemorySpace.SMEM)

    # ---- pass 1: global (training-mode) BatchNorm batch statistics ----
    sums, sqs = pl.pallas_call(
        _bn_stats_kernel,
        out_shape=(jax.ShapeDtypeStruct((1, PADDED_FEAT), jnp.float32),
                   jax.ShapeDtypeStruct((1, PADDED_FEAT), jnp.float32)),
        grid=grid,
        in_specs=[smem,
                  pl.BlockSpec((tile_n, PADDED_FEAT), lambda i: (i, 0))],
        out_specs=(pl.BlockSpec((1, PADDED_FEAT), lambda i: (0, 0)),
                   pl.BlockSpec((1, PADDED_FEAT), lambda i: (0, 0))),
        compiler_params=pltpu.CompilerParams(dimension_semantics=("arbitrary",)),
    )(nrows, x_p)

    # Fold BN into a single per-feature affine: y = x*scale + shift (biased batch var).
    # TODO(synk): one-pass E[x^2]-E[x]^2 can lose precision for large-mean features; fine for
    #             roughly standardized inputs (guarded with max(var, 0)).
    mean = sums / N
    var = jnp.maximum(sqs / N - mean * mean, 0.0)
    scale = gamma_p * jax.lax.rsqrt(var + BN_EPS)     # zero on pad lanes (gamma_p pad == 0)
    shift = beta_p - mean * scale

    # ---- pass 2: fused BN-affine + fc1 + ReLU + fc2 + sigmoid, gridded over the batch ----
    out = pl.pallas_call(
        _nn_fused_kernel,
        out_shape=jax.ShapeDtypeStruct((N, 1), jnp.float32),
        grid=grid,
        in_specs=[pl.BlockSpec((tile_n, PADDED_FEAT), lambda i: (i, 0)),
                  pl.BlockSpec((1, PADDED_FEAT), lambda i: (0, 0)),
                  pl.BlockSpec((1, PADDED_FEAT), lambda i: (0, 0)),
                  pl.BlockSpec((H, PADDED_HALF), lambda i: (0, 0)),
                  smem, smem, smem],
        out_specs=pl.BlockSpec((tile_n, 1), lambda i: (i, 0)),
        compiler_params=pltpu.CompilerParams(dimension_semantics=("parallel",)),
    )(x_p, scale, shift, w2t, w1_s, b1_s, b2_s)
    return out.reshape(-1)                            # matches torch .view(-1)


def nn_forward_reference(x, gamma, beta, w1, b1, w2, b2, hidden_dim):
    """Plain-JAX reference for correctness checking (training-mode BN)."""
    mean = jnp.mean(x, axis=0, keepdims=True)
    var = jnp.mean((x - mean) ** 2, axis=0, keepdims=True)
    xn = (x - mean) / jnp.sqrt(var + BN_EPS) * gamma[None, :] + beta[None, :]
    pairs = jnp.stack([xn[:, :HALF], xn[:, HALF:]], axis=2)          # (N, HALF, 2)
    h = jnp.maximum(pairs @ w1.T + b1, 0.0)                          # (N, HALF, H)
    flat = h.reshape(x.shape[0], -1)                                 # (N, HALF*H)
    logits = flat @ w2.reshape(-1) + b2[0]
    return jax.nn.sigmoid(logits)


if __name__ == "__main__":
    N = 300            # not a multiple of the tile: exercises grid, accumulation and row masking
    HIDDEN = 16

    key = jax.random.PRNGKey(0)
    kx, kg, kb, kw1, kb1, kw2, kb2 = jax.random.split(key, 7)

    x = jax.random.normal(kx, (N, INPUT_SIZE), dtype=jnp.float32)
    gamma = jax.random.uniform(kg, (INPUT_SIZE,), jnp.float32, 0.5, 1.5)
    beta = 0.1 * jax.random.normal(kb, (INPUT_SIZE,), dtype=jnp.float32)
    lim1 = 1.0 / jnp.sqrt(2.0)
    w1 = jax.random.uniform(kw1, (HIDDEN, 2), jnp.float32, -lim1, lim1)
    b1 = jax.random.uniform(kb1, (HIDDEN,), jnp.float32, -lim1, lim1)
    lim2 = 1.0 / jnp.sqrt(float(HALF * HIDDEN))
    w2 = jax.random.uniform(kw2, (1, HALF * HIDDEN), jnp.float32, -lim2, lim2)
    b2 = jax.random.uniform(kb2, (1,), jnp.float32, -lim2, lim2)

    out = jax.block_until_ready(
        nn_forward(x, gamma, beta, w1, b1, w2, b2, HIDDEN, tile_n=128))
    ref = jax.block_until_ready(
        nn_forward_reference(x, gamma, beta, w1, b1, w2, b2, HIDDEN))

    assert out.shape == (N,)
    err = float(jnp.max(jnp.abs(out - ref)))
    assert err < 5e-5, err
    print("KERNEL_OK")
</pallas_src>

<mosaic_0001>
module attributes {stable_mosaic.version = 11 : i64} {
  func.func @_bn_stats_kernel(%arg0: i32, %arg1: memref<1xi32, #tpu.memory_space<smem>>, %arg2: memref<128x512xf32, #tpu.memory_space<vmem>>, %arg3: memref<1x512xf32, #tpu.memory_space<vmem>>, %arg4: memref<1x512xf32, #tpu.memory_space<vmem>>) attributes {dimension_semantics = [#tpu.dimension_semantics<arbitrary>], iteration_bounds = array<i64: 3>, scalar_prefetch = 0 : i64, scratch_operands = 0 : i64, tpu.core_type = #tpu.core_type<tc>, window_params = [{transform_indices = @transform_0, window_bounds = array<i64: 1>}, {transform_indices = @transform_1, window_bounds = array<i64: 128, 512>}, {pipeline_mode = #tpu.pipeline_mode<synchronous>, transform_indices = @transform_2, window_bounds = array<i64: 1, 512>}, {pipeline_mode = #tpu.pipeline_mode<synchronous>, transform_indices = @transform_3, window_bounds = array<i64: 1, 512>}]} {
    %c0_i32 = arith.constant 0 : i32
    %0 = arith.cmpi eq, %arg0, %c0_i32 : i32
    %1 = arith.extui %0 : i1 to i32
    %c0_i32_0 = arith.constant 0 : i32
    %2 = arith.cmpi ne, %1, %c0_i32_0 : i32
    scf.if %2 {
      %cst_13 = arith.constant 0.000000e+00 : f32
      %24 = vector.broadcast %cst_13 : f32 to vector<1x512xf32>
      %c0_14 = arith.constant 0 : index
      %c0_15 = arith.constant 0 : index
      %25 = vector.load %arg3[%c0_14, %c0_15] : memref<1x512xf32, #tpu.memory_space<vmem>>, vector<1x512xf32>
      tpu.vector_store %arg3[%c0_14, %c0_15], %24 {strides = array<i32>} : memref<1x512xf32, #tpu.memory_space<vmem>>, vector<1x512xf32>,
      %cst_16 = arith.constant 0.000000e+00 : f32
      %26 = vector.broadcast %cst_16 : f32 to vector<1x512xf32>
      %c0_17 = arith.constant 0 : index
      %c0_18 = arith.constant 0 : index
      %27 = vector.load %arg4[%c0_17, %c0_18] : memref<1x512xf32, #tpu.memory_space<vmem>>, vector<1x512xf32>
      tpu.vector_store %arg4[%c0_17, %c0_18], %26 {strides = array<i32>} : memref<1x512xf32, #tpu.memory_space<vmem>>, vector<1x512xf32>,
    } else {
    }
    %c128_i32 = arith.constant 128 : i32
    %3 = arith.muli %arg0, %c128_i32 : i32
    %4 = tpu.iota {dimensions = array<i32: 0>} : vector<128x512xi32>
    %5 = vector.broadcast %3 : i32 to vector<128x512xi32>
    %6 = arith.addi %4, %5 : vector<128x512xi32>
    %c0 = arith.constant 0 : index
    %7 = memref.load %arg1[%c0] : memref<1xi32, #tpu.memory_space<smem>>
    %8 = vector.broadcast %7 : i32 to vector<128x512xi32>
    %9 = arith.cmpi slt, %6, %8 : vector<128x512xi32>
    %c0_1 = arith.constant 0 : index
    %c0_2 = arith.constant 0 : index
    %10 = vector.load %arg2[%c0_1, %c0_2] : memref<128x512xf32, #tpu.memory_space<vmem>>, vector<128x512xf32>
    %cst = arith.constant 0.000000e+00 : f32
    %11 = vector.broadcast %cst : f32 to vector<128x512xf32>
    %12 = arith.select %9, %10, %11 : vector<128x512xi1>, vector<128x512xf32>
    %c0_3 = arith.constant 0 : index
    %c0_4 = arith.constant 0 : index
    %13 = vector.load %arg3[%c0_3, %c0_4] : memref<1x512xf32, #tpu.memory_space<vmem>>, vector<1x512xf32>
    %cst_5 = arith.constant dense<0.000000e+00> : vector<512xf32>
    %14 = vector.multi_reduction <add>, %12, %cst_5 [0] : vector<128x512xf32> to vector<512xf32>
    %15 = vector.shape_cast %14 : vector<512xf32> to vector<1x512xf32>
    %16 = arith.addf %13, %15 : vector<1x512xf32>
    %c0_6 = arith.constant 0 : index
    %c0_7 = arith.constant 0 : index
    %17 = vector.load %arg3[%c0_6, %c0_7] : memref<1x512xf32, #tpu.memory_space<vmem>>, vector<1x512xf32>
    tpu.vector_store %arg3[%c0_6, %c0_7], %16 {strides = array<i32>} : memref<1x512xf32, #tpu.memory_space<vmem>>, vector<1x512xf32>,
    %c0_8 = arith.constant 0 : index
    %c0_9 = arith.constant 0 : index
    %18 = vector.load %arg4[%c0_8, %c0_9] : memref<1x512xf32, #tpu.memory_space<vmem>>, vector<1x512xf32>
    %19 = arith.mulf %12, %12 : vector<128x512xf32>
    %cst_10 = arith.constant dense<0.000000e+00> : vector<512xf32>
    %20 = vector.multi_reduction <add>, %19, %cst_10 [0] : vector<128x512xf32> to vector<512xf32>
    %21 = vector.shape_cast %20 : vector<512xf32> to vector<1x512xf32>
    %22 = arith.addf %18, %21 : vector<1x512xf32>
    %c0_11 = arith.constant 0 : index
    %c0_12 = arith.constant 0 : index
    %23 = vector.load %arg4[%c0_11, %c0_12] : memref<1x512xf32, #tpu.memory_space<vmem>>, vector<1x512xf32>
    tpu.vector_store %arg4[%c0_11, %c0_12], %22 {strides = array<i32>} : memref<1x512xf32, #tpu.memory_space<vmem>>, vector<1x512xf32>,
    return
  }
  func.func @transform_0(%arg0: i32) -> i32 {
    %c0_i32 = arith.constant 0 : i32
    %c0_i32_0 = arith.constant 0 : i32
    return %c0_i32 : i32
  }
  func.func @transform_1(%arg0: i32) -> (i32, i32) {
    %c0_i32 = arith.constant 0 : i32
    %c0_i32_0 = arith.constant 0 : i32
    return %arg0, %c0_i32 : i32, i32
  }
  func.func @transform_2(%arg0: i32) -> (i32, i32) {
    %c0_i32 = arith.constant 0 : i32
    %c0_i32_0 = arith.constant 0 : i32
    %c0_i32_1 = arith.constant 0 : i32
    return %c0_i32, %c0_i32_0 : i32, i32
  }
  func.func @transform_3(%arg0: i32) -> (i32, i32) {
    %c0_i32 = arith.constant 0 : i32
    %c0_i32_0 = arith.constant 0 : i32
    %c0_i32_1 = arith.constant 0 : i32
    return %c0_i32, %c0_i32_0 : i32, i32
  }
}

</mosaic_0001>

<llo_original>
// kernel: tpu_custom_call.1
$region0: #{tpu_custom_call.1}
  #allocation0 [shape = 'u32[]', space=smem, size = 0x4, offset = 0x4, fixed_abs, tag = 'smem constant byte address 0x4 - core index']
  #allocation1 [shape = 'u32[144,128]{1,0:T(1,128)}', space=vmem, size = 0x12000, scoped, tag = 'internal scratch']
  #allocation2 [shape = 's32[1]{0:T(128)S(6)}', space=smem, size = 0x200, scoped, tag = 'scoped memory for tpu_custom_call.1']
  %s0 = inlined_call_operand.<no memory space> [shape: s32[1], index: 0, kind: input, shape index: {}]
  %s1 = inlined_call_operand.hbm [shape: f32[300,512], index: 1, kind: input, shape index: {}]
  %s2 = inlined_call_operand.hbm [shape: f32[1,512], index: 2, kind: output, shape index: {0}]
  %s3 = inlined_call_operand.hbm [shape: f32[1,512], index: 3, kind: output, shape index: {1}]
  %4 = xla_tuple %s2, %s3
  %s5 = sld [smem:[#allocation0]]
  $region57: #{tpu_custom_call.1} parent=0
    _
  %s7 = ssub.s32 1, %s5
  %s8 = scalar_select 0, %s7, %s5
  %9 = sst [smem:[#allocation2]] %s0
  $region1: #{tpu_custom_call.1} parent=0
    #allocation3 [shape = 'u8[524288]{0}', space=vmem, size = 0x80000, scoped, tag = 'input window, operand 1']
    #allocation4 [shape = 's32[2]{0}', space=sflag, size = 0x8, scoped, tag = 'scoped memory for tpu_custom_call.1']
    #allocation5 [shape = 's32[2]{0}', space=sflag, size = 0x8, scoped, tag = 'scoped memory for tpu_custom_call.1']
    #allocation6 [shape = 'u8[2048]{0}', space=vmem, size = 0x800, scoped, tag = 'output window, operand 0, single buffered']
    #allocation7 [shape = 'u8[2048]{0}', space=vmem, size = 0x800, scoped, tag = 'output window, operand 1, single buffered']
    #allocation8 [shape = 's32[1]{0}', space=sflag, size = 0x4, scoped, tag = 'scoped memory for tpu_custom_call.1']
    %10 = vsyncpa [#allocation4], 0
    %s11 = scalar_lea.sflag [#allocation4], 1
    %12 = vsyncpa %s11, 0
    %13 = vsyncpa [#allocation5], 0
    %14 = vsyncpa [#allocation8], 0
    loop: start=0, step=1, limit=5
    $region2: #{tpu_custom_call.1} parent=1 // loop_pre_header
      _
    $region3: #{tpu_custom_call.1} parent=1 // loop_header
      %s16 = sphi 0, %s20
      %p17 = scmp.ge.s32.totalorder %s16, 5
      %s24 = sphi 0, %s24
      %s26 = sphi 0, %s24
      %s27 = sphi 0, %s26
      %s41 = sphi 0, %s27
      %s47 = sphi 0, %s49
      %s50 = sphi 0, %s47
      %s51 = sphi 0, %s50
      %s67 = sphi 0, %s51
      %s71 = sphi 0, %s71
      %s73 = sphi 0, %s71
      %s74 = sphi 0, %s73
      %s88 = sphi 0, %s74
      %s92 = sphi 0, %s92
      %s94 = sphi 0, %s92
      %s95 = sphi 0, %s94
      %s109 = sphi 0, %s95
    $region4: #{tpu_custom_call.1} parent=1 // loop_header_branch
      %19 = sbr.rel (%p17) target = $region8
    $region5: #{tpu_custom_call.1} parent=1 // loop_body
      %s21 = ssub.s32 %s16, 1
      %s22 = ssub.s32 %s16, 2
      %s23 = sadd.s32 %s16, 1
      %s25 = sadd.s32 %s24, 1
      %p28 = scmp.eq.s32.totalorder %s16, 2
      %p29 = scmp.ne.s32.totalorder %s24, %s26
      %p30 = scmp.eq.s32.totalorder %s16, 0
      %p31 = por %p29, %p30
      %p32 = scmp.ne.s32.totalorder %s24, %s26
      %p33 = scmp.eq.s32.totalorder %s21, 2
      %p34 = por %p32, %p33
      %p35 = scmp.ne.s32.totalorder %s26, %s27
      %p36 = scmp.eq.s32.totalorder %s21, 0
      %p37 = por %p35, %p36
      %p38 = scmp.ne.s32.totalorder %s26, %s27
      %p39 = scmp.eq.s32.totalorder %s22, 2
      %p40 = por %p38, %p39
      %p42 = scmp.ne.s32.totalorder %s27, %s41
      %p43 = scmp.eq.s32.totalorder %s22, 0
      %p44 = por %p42, %p43
      %s45 = ssub.s32 %s16, %s23
      %p46 = scmp.eq.s32.totalorder %s45, 0
      %s48 = sadd.s32 %s47, 1
      %s49 = scalar_select %p46, %s47, %s48
      %p52 = pneg %p46
      %p53 = scmp.eq.s32.totalorder %s16, 2
      %p54 = por %p52, %p53
      %p55 = scmp.ne.s32.totalorder %s47, %s50
      %p56 = scmp.eq.s32.totalorder %s16, 0
      %p57 = por %p55, %p56
      %p58 = scmp.ne.s32.totalorder %s47, %s50
      %p59 = scmp.eq.s32.totalorder %s21, 2
      %p60 = por %p58, %p59
      %p61 = scmp.ne.s32.totalorder %s50, %s51
      %p62 = scmp.eq.s32.totalorder %s21, 0
      %p63 = por %p61, %p62
      %p64 = scmp.ne.s32.totalorder %s50, %s51
      %p65 = scmp.eq.s32.totalorder %s22, 2
      %p66 = por %p64, %p65
      %p68 = scmp.ne.s32.totalorder %s51, %s67
      %p69 = scmp.eq.s32.totalorder %s22, 0
      %p70 = por %p68, %p69
      %s72 = sadd.s32 %s71, 1
      %p75 = scmp.eq.s32.totalorder %s16, 2
      %p76 = scmp.ne.s32.totalorder %s71, %s73
      %p77 = scmp.eq.s32.totalorder %s16, 0
      %p78 = por %p76, %p77
      %p79 = scmp.ne.s32.totalorder %s71, %s73
      %p80 = scmp.eq.s32.totalorder %s21, 2
      %p81 = por %p79, %p80
      %p82 = scmp.ne.s32.totalorder %s73, %s74
      %p83 = scmp.eq.s32.totalorder %s21, 0
      %p84 = por %p82, %p83
      %p85 = scmp.ne.s32.totalorder %s73, %s74
      %p86 = scmp.eq.s32.totalorder %s22, 2
      %p87 = por %p85, %p86
      %p89 = scmp.ne.s32.totalorder %s74, %s88
      %p90 = scmp.eq.s32.totalorder %s22, 0
      %p91 = por %p89, %p90
      %s93 = sadd.s32 %s92, 1
      %p96 = scmp.eq.s32.totalorder %s16, 2
      %p97 = scmp.ne.s32.totalorder %s92, %s94
      %p98 = scmp.eq.s32.totalorder %s16, 0
      %p99 = por %p97, %p98
      %p100 = scmp.ne.s32.totalorder %s92, %s94
      %p101 = scmp.eq.s32.totalorder %s21, 2
      %p102 = por %p100, %p101
      %p103 = scmp.ne.s32.totalorder %s94, %s95
      %p104 = scmp.eq.s32.totalorder %s21, 0
      %p105 = por %p103, %p104
      %p106 = scmp.ne.s32.totalorder %s94, %s95
      %p107 = scmp.eq.s32.totalorder %s22, 2
      %p108 = por %p106, %p107
      %p110 = scmp.ne.s32.totalorder %s95, %s109
      %p111 = scmp.eq.s32.totalorder %s22, 0
      %p112 = por %p110, %p111
      %p113 = scmp.le.s32.totalorder 1, %s16
      %p114 = scmp.lt.s32.totalorder %s16, 4
      %p115 = pnand %p113, %p114
      %p116 = pneg %p115
      // Predicated region
      $region9: #{tpu_custom_call.1} parent=5 // pred_check
        _
      $region10: #{tpu_custom_call.1} parent=5 // pred_check_branch
        %118 = sbr.rel (%p115) target = $region12
      $region11: #{tpu_custom_call.1} parent=5 // pred_region
        %s119 = ssub.s32 %s16, 1
        // Predicated region
        $region13: #{tpu_custom_call.1} parent=11 // pred_check
          %p120 = pneg %p37
        $region14: #{tpu_custom_call.1} parent=11 // pred_check_branch
          %122 = sbr.rel (%p120) target = $region16
        $region15: #{tpu_custom_call.1} parent=11 // pred_region
          _
        $region16: #{tpu_custom_call.1} parent=11 // pred_fallthru
          _
      $region12: #{tpu_custom_call.1} parent=5 // pred_fallthru
        _
      %p123 = scmp.lt.s32.totalorder %s16, 3
      // Predicated region
      $region17: #{tpu_custom_call.1} parent=5 // pred_check
        %p124 = pneg %p123
      $region18: #{tpu_custom_call.1} parent=5 // pred_check_branch
        %126 = sbr.rel (%p124) target = $region20
      $region19: #{tpu_custom_call.1} parent=5 // pred_region
        // Predicated region
        $region21: #{tpu_custom_call.1} parent=19 // pred_check
          %p127 = pneg %p57
        $region22: #{tpu_custom_call.1} parent=19 // pred_check_branch
          %129 = sbr.rel (%p127) target = $region24
        $region23: #{tpu_custom_call.1} parent=19 // pred_region
          %s130 = sand.u32 %s47, 1
          %s131 = scalar_lea.sflag [#allocation4], %s130
          %s132 = sand.u32 %s47, 1
          %s133 = smul.addr %s132, 512
          %s134 = scalar_lea.vmem [#allocation3], %s133
          %s135 = smul.u32 16, %s16
          %s136 = ssub.s32 38, %s135
          %p137 = scmp.lt.s32.totalorder %s136, 16
          %s138 = scalar_select %p137, %s136, 16
          %s139 = smul.u32 128, %s138
          %s140 = smul.u32 %s139, 4
          %s142 = ssub.s32 8192, %s140
          %143 = vsyncadd %s131, %s142
          %p144 = scmp.ne.s32.totalorder 0, %s140
          %s145 = smul.addr %s135, 4
          %s146 = smul.addr %s145, 128
          %s147 = scalar_lea.hbm %s1, %s146
          %s148 = smul.u32 32, %s138
          %s149 = sshll.u32 %s134, 4
          %s150 = int_to_ptr.vmem [resolvable:$true] %s149
          %s151 = sshll.u32 %s148, 4
          %155 = dma.hbm_to_vmem [thread:$0]  (%p144), %s147, %s151, %s150, %s131, 512, 512, 32
        $region24: #{tpu_custom_call.1} parent=19 // pred_fallthru
          _
      $region20: #{tpu_custom_call.1} parent=5 // pred_fallthru
        _
      %p156 = scmp.le.s32.totalorder 1, %s16
      %p157 = scmp.lt.s32.totalorder %s16, 4
      %p158 = pnand %p156, %p157
      %p159 = pneg %p158
      // Predicated region
      $region25: #{tpu_custom_call.1} parent=5 // pred_check
        _
      $region26: #{tpu_custom_call.1} parent=5 // pred_check_branch
        %161 = sbr.rel (%p158) target = $region28
      $region27: #{tpu_custom_call.1} parent=5 // pred_region
        %s162 = ssub.s32 %s16, 1
        %s163 = sand.u32 %s50, 1
        %s164 = scalar_lea.sflag [#allocation4], %s163
        %s165 = sand.u32 %s50, 1
        %s166 = smul.addr %s165, 512
        %s167 = scalar_lea.vmem [#allocation3], %s166
        // Predicated region
        $region29: #{tpu_custom_call.1} parent=27 // pred_check
          %p168 = pneg %p63
        $region30: #{tpu_custom_call.1} parent=27 // pred_check_branch
          %170 = sbr.rel (%p168) target = $region32
        $region31: #{tpu_custom_call.1} parent=27 // pred_region
          %171 = dma.done %s164, 8192
        $region32: #{tpu_custom_call.1} parent=27 // pred_fallthru
          _
        %p172 = pneg %p37
        %p173 = pneg %p34
        %s174 = sand.u32 %s50, 1
        %s175 = scalar_lea.sflag [#allocation4], %s174
        %s176 = sand.u32 %s50, 1
        %s177 = smul.addr %s176, 512
        %s178 = scalar_lea.vmem [#allocation3], %s177
        %p179 = pneg %p63
        %p180 = pneg %p60
        %p181 = pneg %p84
        %p182 = pneg %p81
        %p183 = pneg %p105
        %p184 = pneg %p102
        %s185 = smul.u32 16, %s21
        %s186 = ssub.s32 38, %s185
        %p187 = scmp.lt.s32.totalorder %s186, 16
        %s188 = scalar_select %p187, %s186, 16
        %s189 = smul.u32 128, %s188
        %s190 = smul.u32 %s189, 4
        %p191 = scmp.eq.s32.totalorder %s21, 0
        // Predicated region
        $region33: #{tpu_custom_call.1} parent=27 // pred_check
          %p192 = pneg %p191
        $region34: #{tpu_custom_call.1} parent=27 // pred_check_branch
          %194 = sbr.rel (%p192) target = $region36
        $region35: #{tpu_custom_call.1} parent=27 // pred_region
          %v195 = vlaneseq
          %vm196 = vcmp.ge.s32.totalorder %v195, 0
          %vm197 = vcmp.lt.s32.totalorder %v195, 512
          %vm198 = vmand %vm196, %vm197
          %199 = vst.msk [vmem:[#allocation6] sm:$0xf] %vm198, 0.0
          %200 = vst.msk [vmem:[#allocation7] sm:$0xf] %vm198, 0.0
        $region36: #{tpu_custom_call.1} parent=27 // pred_fallthru
          _
        %s201 = smul.u32 %s21, 128
        %v202 = vlaneseq
        %v203 = vshrl.u32 %v202, 7
        %v204 = vadd.s32 %v203, 8
        %v205 = vadd.s32 %v203, 16
        %v206 = vadd.s32 %v203, 24
        %v207 = vadd.s32 %v203, 32
        %v208 = vadd.s32 %v203, 40
        %v209 = vadd.s32 %v203, 48
        %v210 = vadd.s32 %v203, 56
        %v211 = vadd.s32 %v203, 64
        %v212 = vadd.s32 %v203, 72
        %v213 = vadd.s32 %v203, 80
        %v214 = vadd.s32 %v203, 88
        %v215 = vadd.s32 %v203, 96
        %v216 = vadd.s32 %v203, 104
        %v217 = vadd.s32 %v203, 112
        %v218 = vadd.s32 %v203, 120
        %v219 = vstv %s201
        %v220 = vadd.s32 %v203, %v219
        %v221 = vadd.s32 %v204, %v219
        %v222 = vadd.s32 %v205, %v219
        %v223 = vadd.s32 %v206, %v219
        %v224 = vadd.s32 %v207, %v219
        %v225 = vadd.s32 %v208, %v219
        %v226 = vadd.s32 %v209, %v219
        %v227 = vadd.s32 %v210, %v219
        %v228 = vadd.s32 %v211, %v219
        %v229 = vadd.s32 %v212, %v219
        %v230 = vadd.s32 %v213, %v219
        %v231 = vadd.s32 %v214, %v219
        %v232 = vadd.s32 %v215, %v219
        %v233 = vadd.s32 %v216, %v219
        %v234 = vadd.s32 %v217, %v219
        %v235 = vadd.s32 %v218, %v219
        %s236 = sld [smem:[#allocation2]]
        %v237 = vstv %s236
        %vm238 = vcmp.lt.s32.totalorder %v220, %v237
        %vm239 = vcmp.lt.s32.totalorder %v221, %v237
        %vm240 = vcmp.lt.s32.totalorder %v222, %v237
        %vm241 = vcmp.lt.s32.totalorder %v223, %v237
        %vm242 = vcmp.lt.s32.totalorder %v224, %v237
        %vm243 = vcmp.lt.s32.totalorder %v225, %v237
        %vm244 = vcmp.lt.s32.totalorder %v226, %v237
        %vm245 = vcmp.lt.s32.totalorder %v227, %v237
        %vm246 = vcmp.lt.s32.totalorder %v228, %v237
        %vm247 = vcmp.lt.s32.totalorder %v229, %v237
        %vm248 = vcmp.lt.s32.totalorder %v230, %v237
        %vm249 = vcmp.lt.s32.totalorder %v231, %v237
        %vm250 = vcmp.lt.s32.totalorder %v232, %v237
        %vm251 = vcmp.lt.s32.totalorder %v233, %v237
        %vm252 = vcmp.lt.s32.totalorder %v234, %v237
        %vm253 = vcmp.lt.s32.totalorder %v235, %v237
        %v254 = vld [vmem:[%s167] sm:$0xff]
        %v255 = vld [vmem:[%s167 + $0x8] sm:$0xff]
        %v256 = vld [vmem:[%s167 + $0x10] sm:$0xff]
        %v257 = vld [vmem:[%s167 + $0x18] sm:$0xff]
        %v258 = vld [vmem:[%s167 + $0x20] sm:$0xff]
        %v259 = vld [vmem:[%s167 + $0x28] sm:$0xff]
        %v260 = vld [vmem:[%s167 + $0x30] sm:$0xff]
        %v261 = vld [vmem:[%s167 + $0x38] sm:$0xff]
        %v262 = vld [vmem:[%s167 + $0x40] sm:$0xff]
        %v263 = vld [vmem:[%s167 + $0x48] sm:$0xff]
        %v264 = vld [vmem:[%s167 + $0x50] sm:$0xff]
        %v265 = vld [vmem:[%s167 + $0x58] sm:$0xff]
        %v266 = vld [vmem:[%s167 + $0x60] sm:$0xff]
        %v267 = vld [vmem:[%s167 + $0x68] sm:$0xff]
        %v268 = vld [vmem:[%s167 + $0x70] sm:$0xff]
        %v269 = vld [vmem:[%s167 + $0x78] sm:$0xff]
        %v270 = vld [vmem:[%s167 + $0x80] sm:$0xff]
        %v271 = vld [vmem:[%s167 + $0x88] sm:$0xff]
        %v272 = vld [vmem:[%s167 + $0x90] sm:$0xff]
        %v273 = vld [vmem:[%s167 + $0x98] sm:$0xff]
        %v274 = vld [vmem:[%s167 + $0xa0] sm:$0xff]
        %v275 = vld [vmem:[%s167 + $0xa8] sm:$0xff]
        %v276 = vld [vmem:[%s167 + $0xb0] sm:$0xff]
        %v277 = vld [vmem:[%s167 + $0xb8] sm:$0xff]
        %v278 = vld [vmem:[%s167 + $0xc0] sm:$0xff]
        %v279 = vld [vmem:[%s167 + $0xc8] sm:$0xff]
        %v280 = vld [vmem:[%s167 + $0xd0] sm:$0xff]
        %v281 = vld [vmem:[%s167 + $0xd8] sm:$0xff]
        %v282 = vld [vmem:[%s167 + $0xe0] sm:$0xff]
        %v283 = vld [vmem:[%s167 + $0xe8] sm:$0xff]
        %v284 = vld [vmem:[%s167 + $0xf0] sm:$0xff]
        %v285 = vld [vmem:[%s167 + $0xf8] sm:$0xff]
        %v286 = vld [vmem:[%s167 + $0x100] sm:$0xff]
        %v287 = vld [vmem:[%s167 + $0x108] sm:$0xff]
        %v288 = vld [vmem:[%s167 + $0x110] sm:$0xff]
        %v289 = vld [vmem:[%s167 + $0x118] sm:$0xff]
        %v290 = vld [vmem:[%s167 + $0x120] sm:$0xff]
        %v291 = vld [vmem:[%s167 + $0x128] sm:$0xff]
        %v292 = vld [vmem:[%s167 + $0x130] sm:$0xff]
        %v293 = vld [vmem:[%s167 + $0x138] sm:$0xff]
        %v294 = vld [vmem:[%s167 + $0x140] sm:$0xff]
        %v295 = vld [vmem:[%s167 + $0x148] sm:$0xff]
        %v296 = vld [vmem:[%s167 + $0x150] sm:$0xff]
        %v297 = vld [vmem:[%s167 + $0x158] sm:$0xff]
        %v298 = vld [vmem:[%s167 + $0x160] sm:$0xff]
        %v299 = vld [vmem:[%s167 + $0x168] sm:$0xff]
        %v300 = vld [vmem:[%s167 + $0x170] sm:$0xff]
        %v301 = vld [vmem:[%s167 + $0x178] sm:$0xff]
        %v302 = vld [vmem:[%s167 + $0x180] sm:$0xff]
        %v303 = vld [vmem:[%s167 + $0x188] sm:$0xff]
        %v304 = vld [vmem:[%s167 + $0x190] sm:$0xff]
        %v305 = vld [vmem:[%s167 + $0x198] sm:$0xff]
        %v306 = vld [vmem:[%s167 + $0x1a0] sm:$0xff]
        %v307 = vld [vmem:[%s167 + $0x1a8] sm:$0xff]
        %v308 = vld [vmem:[%s167 + $0x1b0] sm:$0xff]
        %v309 = vld [vmem:[%s167 + $0x1b8] sm:$0xff]
        %v310 = vld [vmem:[%s167 + $0x1c0] sm:$0xff]
        %v311 = vld [vmem:[%s167 + $0x1c8] sm:$0xff]
        %v312 = vld [vmem:[%s167 + $0x1d0] sm:$0xff]
        %v313 = vld [vmem:[%s167 + $0x1d8] sm:$0xff]
        %v314 = vld [vmem:[%s167 + $0x1e0] sm:$0xff]
        %v315 = vld [vmem:[%s167 + $0x1e8] sm:$0xff]
        %v316 = vld [vmem:[%s167 + $0x1f0] sm:$0xff]
        %v317 = vld [vmem:[%s167 + $0x1f8] sm:$0xff]
        %v318 = vsel %vm238, %v254, 0.0
        %v319 = vsel %vm238, %v255, 0.0
        %v320 = vsel %vm238, %v256, 0.0
        %v321 = vsel %vm238, %v257, 0.0
        %v322 = vsel %vm239, %v258, 0.0
        %v323 = vsel %vm239, %v259, 0.0
        %v324 = vsel %vm239, %v260, 0.0
        %v325 = vsel %vm239, %v261, 0.0
        %v326 = vsel %vm240, %v262, 0.0
        %v327 = vsel %vm240, %v263, 0.0
        %v328 = vsel %vm240, %v264, 0.0
        %v329 = vsel %vm240, %v265, 0.0
        %v330 = vsel %vm241, %v266, 0.0
        %v331 = vsel %vm241, %v267, 0.0
        %v332 = vsel %vm241, %v268, 0.0
        %v333 = vsel %vm241, %v269, 0.0
        %v334 = vsel %vm242, %v270, 0.0
        %v335 = vsel %vm242, %v271, 0.0
        %v336 = vsel %vm242, %v272, 0.0
        %v337 = vsel %vm242, %v273, 0.0
        %v338 = vsel %vm243, %v274, 0.0
        %v339 = vsel %vm243, %v275, 0.0
        %v340 = vsel %vm243, %v276, 0.0
        %v341 = vsel %vm243, %v277, 0.0
        %v342 = vsel %vm244, %v278, 0.0
        %v343 = vsel %vm244, %v279, 0.0
        %v344 = vsel %vm244, %v280, 0.0
        %v345 = vsel %vm244, %v281, 0.0
        %v346 = vsel %vm245, %v282, 0.0
        %v347 = vsel %vm245, %v283, 0.0
        %v348 = vsel %vm245, %v284, 0.0
        %v349 = vsel %vm245, %v285, 0.0
        %v350 = vsel %vm246, %v286, 0.0
        %v351 = vsel %vm246, %v287, 0.0
        %v352 = vsel %vm246, %v288, 0.0
        %v353 = vsel %vm246, %v289, 0.0
        %v354 = vsel %vm247, %v290, 0.0
        %v355 = vsel %vm247, %v291, 0.0
        %v356 = vsel %vm247, %v292, 0.0
        %v357 = vsel %vm247, %v293, 0.0
        %v358 = vsel %vm248, %v294, 0.0
        %v359 = vsel %vm248, %v295, 0.0
        %v360 = vsel %vm248, %v296, 0.0
        %v361 = vsel %vm248, %v297, 0.0
        %v362 = vsel %vm249, %v298, 0.0
        %v363 = vsel %vm249, %v299, 0.0
        %v364 = vsel %vm249, %v300, 0.0
        %v365 = vsel %vm249, %v301, 0.0
        %v366 = vsel %vm250, %v302, 0.0
        %v367 = vsel %vm250, %v303, 0.0
        %v368 = vsel %vm250, %v304, 0.0
        %v369 = vsel %vm250, %v305, 0.0
        %v370 = vsel %vm251, %v306, 0.0
        %v371 = vsel %vm251, %v307, 0.0
        %v372 = vsel %vm251, %v308, 0.0
        %v373 = vsel %vm251, %v309, 0.0
        %v374 = vsel %vm252, %v310, 0.0
        %v375 = vsel %vm252, %v311, 0.0
        %v376 = vsel %vm252, %v312, 0.0
        %v377 = vsel %vm252, %v313, 0.0
        %v378 = vsel %vm253, %v314, 0.0
        %v379 = vsel %vm253, %v315, 0.0
        %v380 = vsel %vm253, %v316, 0.0
        %v381 = vsel %vm253, %v317, 0.0
        %v382 = vld [vmem:[#allocation6] sm:$0xf]
        %v383 = vadd.f32 %v318, %v322
        %v384 = vadd.f32 %v383, %v326
        %v385 = vadd.f32 %v384, %v330
        %v386 = vadd.f32 %v385, %v334
        %v387 = vadd.f32 %v386, %v338
        %v388 = vadd.f32 %v387, %v342
        %v389 = vadd.f32 %v388, %v346
        %v390 = vadd.f32 %v389, %v350
        %v391 = vadd.f32 %v390, %v354
        %v392 = vadd.f32 %v391, %v358
        %v393 = vadd.f32 %v392, %v362
        %v394 = vadd.f32 %v393, %v366
        %v395 = vadd.f32 %v394, %v370
        %v396 = vadd.f32 %v395, %v374
        %v397 = vadd.f32 %v396, %v378
        %v398 = vrot.slane %v397, 4
        %v399 = vadd.f32 %v397, %v398
        %v400 = vrot.slane %v399, 2
        %v401 = vadd.f32 %v399, %v400
        %v402 = vrot.slane %v401, 1
        %v403 = vadd.f32 %v401, %v402
        %v404 = vadd.f32 %v319, %v323
        %v405 = vadd.f32 %v404, %v327
        %v406 = vadd.f32 %v405, %v331
        %v407 = vadd.f32 %v406, %v335
        %v408 = vadd.f32 %v407, %v339
        %v409 = vadd.f32 %v408, %v343
        %v410 = vadd.f32 %v409, %v347
        %v411 = vadd.f32 %v410, %v351
        %v412 = vadd.f32 %v411, %v355
        %v413 = vadd.f32 %v412, %v359
        %v414 = vadd.f32 %v413, %v363
        %v415 = vadd.f32 %v414, %v367
        %v416 = vadd.f32 %v415, %v371
        %v417 = vadd.f32 %v416, %v375
        %v418 = vadd.f32 %v417, %v379
        %v419 = vrot.slane %v418, 4
        %v420 = vadd.f32 %v418, %v419
        %v421 = vrot.slane %v420, 2
        %v422 = vadd.f32 %v420, %v421
        %v423 = vrot.slane %v422, 1
        %v424 = vadd.f32 %v422, %v423
        %v425 = vadd.f32 %v320, %v324
        %v426 = vadd.f32 %v425, %v328
        %v427 = vadd.f32 %v426, %v332
        %v428 = vadd.f32 %v427, %v336
        %v429 = vadd.f32 %v428, %v340
        %v430 = vadd.f32 %v429, %v344
        %v431 = vadd.f32 %v430, %v348
        %v432 = vadd.f32 %v431, %v352
        %v433 = vadd.f32 %v432, %v356
        %v434 = vadd.f32 %v433, %v360
        %v435 = vadd.f32 %v434, %v364
        %v436 = vadd.f32 %v435, %v368
        %v437 = vadd.f32 %v436, %v372
        %v438 = vadd.f32 %v437, %v376
        %v439 = vadd.f32 %v438, %v380
        %v440 = vrot.slane %v439, 4
        %v441 = vadd.f32 %v439, %v440
        %v442 = vrot.slane %v441, 2
        %v443 = vadd.f32 %v441, %v442
        %v444 = vrot.slane %v443, 1
        %v445 = vadd.f32 %v443, %v444
        %v446 = vadd.f32 %v321, %v325
        %v447 = vadd.f32 %v446, %v329
        %v448 = vadd.f32 %v447, %v333
        %v449 = vadd.f32 %v448, %v337
        %v450 = vadd.f32 %v449, %v341
        %v451 = vadd.f32 %v450, %v345
        %v452 = vadd.f32 %v451, %v349
        %v453 = vadd.f32 %v452, %v353
        %v454 = vadd.f32 %v453, %v357
        %v455 = vadd.f32 %v454, %v361
        %v456 = vadd.f32 %v455, %v365
        %v457 = vadd.f32 %v456, %v369
        %v458 = vadd.f32 %v457, %v373
        %v459 = vadd.f32 %v458, %v377
        %v460 = vadd.f32 %v459, %v381
        %v461 = vrot.slane %v460, 4
        %v462 = vadd.f32 %v460, %v461
        %v463 = vrot.slane %v462, 2
        %v464 = vadd.f32 %v462, %v463
        %v465 = vrot.slane %v464, 1
        %v466 = vadd.f32 %v464, %v465
        %v471 = vcombine.low %v403, %v424
        %v472 = vcombine.low %v445, %v466
        %v474 = vunpack.c.l.s4 1966171168
        %v475 = vunpack.c.0.s8 %v474
        %v476 = vlaneseq
        %v477 = vshrl.u32 %v476, 7
        %v478 = vsub.s32 %v475, %v477
        %v479 = vrot.slane %v471, %v478
        %v481 = vunpack.c.l.s4 1966171168
        %v482 = vunpack.c.0.s8 %v481
        %v483 = vlaneseq
        %v484 = vshrl.u32 %v483, 7
        %v485 = vsub.s32 %v482, %v484
        %v486 = vrot.slane %v472, %v485
        %v487 = vcombine.low %v479, %v486
        %v489 = vunpack.c.l.s4 1966171168
        %v490 = vunpack.c.0.s8 %v489
        %v491 = vlaneseq
        %v492 = vshrl.u32 %v491, 7
        %v493 = vsub.s32 %v490, %v492
        %v494 = vrot.slane %v487, %v493
        %v496 = vadd.f32 %v382, %v494
        %v497 = vlaneseq
        %vm498 = vcmp.ge.s32.totalorder %v497, 0
        %vm499 = vcmp.lt.s32.totalorder %v497, 512
        %vm500 = vmand %vm498, %vm499
        %501 = vst.msk [vmem:[#allocation6] sm:$0xf] %vm500, %v496
        %v502 = vld [vmem:[#allocation7] sm:$0xf]
        %v503 = vmul.f32 %v318, %v318
        %v504 = vmul.f32 %v319, %v319
        %v505 = vmul.f32 %v320, %v320
        %v506 = vmul.f32 %v321, %v321
        %v507 = vmul.f32 %v322, %v322
        %v508 = vmul.f32 %v323, %v323
        %v509 = vmul.f32 %v324, %v324
        %v510 = vmul.f32 %v325, %v325
        %v511 = vmul.f32 %v326, %v326
        %v512 = vmul.f32 %v327, %v327
        %v513 = vmul.f32 %v328, %v328
        %v514 = vmul.f32 %v329, %v329
        %v515 = vmul.f32 %v330, %v330
        %v516 = vmul.f32 %v331, %v331
        %v517 = vmul.f32 %v332, %v332
        %v518 = vmul.f32 %v333, %v333
        %v519 = vmul.f32 %v334, %v334
        %v520 = vmul.f32 %v335, %v335
        %v521 = vmul.f32 %v336, %v336
        %v522 = vmul.f32 %v337, %v337
        %v523 = vmul.f32 %v338, %v338
        %v524 = vmul.f32 %v339, %v339
        %v525 = vmul.f32 %v340, %v340
        %v526 = vmul.f32 %v341, %v341
        %v527 = vmul.f32 %v342, %v342
        %v528 = vmul.f32 %v343, %v343
        %v529 = vmul.f32 %v344, %v344
        %v530 = vmul.f32 %v345, %v345
        %v531 = vmul.f32 %v346, %v346
        %v532 = vmul.f32 %v347, %v347
        %v533 = vmul.f32 %v348, %v348
        %v534 = vmul.f32 %v349, %v349
        %v535 = vmul.f32 %v350, %v350
        %v536 = vmul.f32 %v351, %v351
        %v537 = vmul.f32 %v352, %v352
        %v538 = vmul.f32 %v353, %v353
        %v539 = vmul.f32 %v354, %v354
        %v540 = vmul.f32 %v355, %v355
        %v541 = vmul.f32 %v356, %v356
        %v542 = vmul.f32 %v357, %v357
        %v543 = vmul.f32 %v358, %v358
        %v544 = vmul.f32 %v359, %v359
        %v545 = vmul.f32 %v360, %v360
        %v546 = vmul.f32 %v361, %v361
        %v547 = vmul.f32 %v362, %v362
        %v548 = vmul.f32 %v363, %v363
        %v549 = vmul.f32 %v364, %v364
        %v550 = vmul.f32 %v365, %v365
        %v551 = vmul.f32 %v366, %v366
        %v552 = vmul.f32 %v367, %v367
        %v553 = vmul.f32 %v368, %v368
        %v554 = vmul.f32 %v369, %v369
        %v555 = vmul.f32 %v370, %v370
        %v556 = vmul.f32 %v371, %v371
        %v557 = vmul.f32 %v372, %v372
        %v558 = vmul.f32 %v373, %v373
        %v559 = vmul.f32 %v374, %v374
        %v560 = vmul.f32 %v375, %v375
        %v561 = vmul.f32 %v376, %v376
        %v562 = vmul.f32 %v377, %v377
        %v563 = vmul.f32 %v378, %v378
        %v564 = vmul.f32 %v379, %v379
        %v565 = vmul.f32 %v380, %v380
        %v566 = vmul.f32 %v381, %v381
        %v567 = vadd.f32 %v503, %v507
        %v568 = vadd.f32 %v567, %v511
        %v569 = vadd.f32 %v568, %v515
        %v570 = vadd.f32 %v569, %v519
        %v571 = vadd.f32 %v570, %v523
        %v572 = vadd.f32 %v571, %v527
        %v573 = vadd.f32 %v572, %v531
        %v574 = vadd.f32 %v573, %v535
        %v575 = vadd.f32 %v574, %v539
        %v576 = vadd.f32 %v575, %v543
        %v577 = vadd.f32 %v576, %v547
        %v578 = vadd.f32 %v577, %v551
        %v579 = vadd.f32 %v578, %v555
        %v580 = vadd.f32 %v579, %v559
        %v581 = vadd.f32 %v580, %v563
        %v582 = vrot.slane %v581, 4
        %v583 = vadd.f32 %v581, %v582
        %v584 = vrot.slane %v583, 2
        %v585 = vadd.f32 %v583, %v584
        %v586 = vrot.slane %v585, 1
        %v587 = vadd.f32 %v585, %v586
        %v588 = vadd.f32 %v504, %v508
        %v589 = vadd.f32 %v588, %v512
        %v590 = vadd.f32 %v589, %v516
        %v591 = vadd.f32 %v590, %v520
        %v592 = vadd.f32 %v591, %v524
        %v593 = vadd.f32 %v592, %v528
        %v594 = vadd.f32 %v593, %v532
        %v595 = vadd.f32 %v594, %v536
        %v596 = vadd.f32 %v595, %v540
        %v597 = vadd.f32 %v596, %v544
        %v598 = vadd.f32 %v597, %v548
        %v599 = vadd.f32 %v598, %v552
        %v600 = vadd.f32 %v599, %v556
        %v601 = vadd.f32 %v600, %v560
        %v602 = vadd.f32 %v601, %v564
        %v603 = vrot.slane %v602, 4
        %v604 = vadd.f32 %v602, %v603
        %v605 = vrot.slane %v604, 2
        %v606 = vadd.f32 %v604, %v605
        %v607 = vrot.slane %v606, 1
        %v608 = vadd.f32 %v606, %v607
        %v609 = vadd.f32 %v505, %v509
        %v610 = vadd.f32 %v609, %v513
        %v611 = vadd.f32 %v610, %v517
        %v612 = vadd.f32 %v611, %v521
        %v613 = vadd.f32 %v612, %v525
        %v614 = vadd.f32 %v613, %v529
        %v615 = vadd.f32 %v614, %v533
        %v616 = vadd.f32 %v615, %v537
        %v617 = vadd.f32 %v616, %v541
        %v618 = vadd.f32 %v617, %v545
        %v619 = vadd.f32 %v618, %v549
        %v620 = vadd.f32 %v619, %v553
        %v621 = vadd.f32 %v620, %v557
        %v622 = vadd.f32 %v621, %v561
        %v623 = vadd.f32 %v622, %v565
        %v624 = vrot.slane %v623, 4
        %v625 = vadd.f32 %v623, %v624
        %v626 = vrot.slane %v625, 2
        %v627 = vadd.f32 %v625, %v626
        %v628 = vrot.slane %v627, 1
        %v629 = vadd.f32 %v627, %v628
        %v630 = vadd.f32 %v506, %v510
        %v631 = vadd.f32 %v630, %v514
        %v632 = vadd.f32 %v631, %v518
        %v633 = vadd.f32 %v632, %v522
        %v634 = vadd.f32 %v633, %v526
        %v635 = vadd.f32 %v634, %v530
        %v636 = vadd.f32 %v635, %v534
        %v637 = vadd.f32 %v636, %v538
        %v638 = vadd.f32 %v637, %v542
        %v639 = vadd.f32 %v638, %v546
        %v640 = vadd.f32 %v639, %v550
        %v641 = vadd.f32 %v640, %v554
        %v642 = vadd.f32 %v641, %v558
        %v643 = vadd.f32 %v642, %v562
        %v644 = vadd.f32 %v643, %v566
        %v645 = vrot.slane %v644, 4
        %v646 = vadd.f32 %v644, %v645
        %v647 = vrot.slane %v646, 2
        %v648 = vadd.f32 %v646, %v647
        %v649 = vrot.slane %v648, 1
        %v650 = vadd.f32 %v648, %v649
        %v655 = vcombine.low %v587, %v608
        %v656 = vcombine.low %v629, %v650
        %v658 = vunpack.c.l.s4 1966171168
        %v659 = vunpack.c.0.s8 %v658
        %v660 = vlaneseq
        %v661 = vshrl.u32 %v660, 7
        %v662 = vsub.s32 %v659, %v661
        %v663 = vrot.slane %v655, %v662
        %v665 = vunpack.c.l.s4 1966171168
        %v666 = vunpack.c.0.s8 %v665
        %v667 = vlaneseq
        %v668 = vshrl.u32 %v667, 7
        %v669 = vsub.s32 %v666, %v668
        %v670 = vrot.slane %v656, %v669
        %v671 = vcombine.low %v663, %v670
        %v673 = vunpack.c.l.s4 1966171168
        %v674 = vunpack.c.0.s8 %v673
        %v675 = vlaneseq
        %v676 = vshrl.u32 %v675, 7
        %v677 = vsub.s32 %v674, %v676
        %v678 = vrot.slane %v671, %v677
        %v680 = vadd.f32 %v502, %v678
        %681 = vst.msk [vmem:[#allocation7] sm:$0xf] %vm500, %v680
        // Predicated region
        $region37: #{tpu_custom_call.1} parent=27 // pred_check
          %p682 = pneg %p81
        $region38: #{tpu_custom_call.1} parent=27 // pred_check_branch
          %684 = sbr.rel (%p682) target = $region40
        $region39: #{tpu_custom_call.1} parent=27 // pred_region
          %s686 = ssub.s32 64, 64
          %687 = vsyncadd [#allocation5], %s686
          %s689 = sshll.u32 [#allocation6], 4
          %s690 = int_to_ptr.vmem [resolvable:$true] %s689
          %692 = dma.vmem_to_hbm [thread:$0]  %s690, 64, %s2, [#allocation5]
        $region40: #{tpu_custom_call.1} parent=27 // pred_fallthru
          _
        // Predicated region
        $region41: #{tpu_custom_call.1} parent=27 // pred_check
          %p693 = pneg %p102
        $region42: #{tpu_custom_call.1} parent=27 // pred_check_branch
          %695 = sbr.rel (%p693) target = $region44
        $region43: #{tpu_custom_call.1} parent=27 // pred_region
          %s697 = ssub.s32 64, 64
          %698 = vsyncadd [#allocation8], %s697
          %s700 = sshll.u32 [#allocation7], 4
          %s701 = int_to_ptr.vmem [resolvable:$true] %s700
          %703 = dma.vmem_to_hbm [thread:$0]  %s701, 64, %s3, [#allocation8]
        $region44: #{tpu_custom_call.1} parent=27 // pred_fallthru
          _
        // Predicated region
        $region45: #{tpu_custom_call.1} parent=27 // pred_check
          %p704 = pneg %p81
        $region46: #{tpu_custom_call.1} parent=27 // pred_check_branch
          %706 = sbr.rel (%p704) target = $region48
        $region47: #{tpu_custom_call.1} parent=27 // pred_region
          %707 = dma.done [#allocation5], 64
        $region48: #{tpu_custom_call.1} parent=27 // pred_fallthru
          _
        // Predicated region
        $region49: #{tpu_custom_call.1} parent=27 // pred_check
          %p708 = pneg %p102
        $region50: #{tpu_custom_call.1} parent=27 // pred_check_branch
          %710 = sbr.rel (%p708) target = $region52
        $region51: #{tpu_custom_call.1} parent=27 // pred_region
          %711 = dma.done [#allocation8], 64
        $region52: #{tpu_custom_call.1} parent=27 // pred_fallthru
          _
      $region28: #{tpu_custom_call.1} parent=5 // pred_fallthru
        _
      %p712 = scmp.le.s32.totalorder 2, %s16
      // Predicated region
      $region53: #{tpu_custom_call.1} parent=5 // pred_check
        %p713 = pneg %p712
      $region54: #{tpu_custom_call.1} parent=5 // pred_check_branch
        %715 = sbr.rel (%p713) target = $region56
      $region55: #{tpu_custom_call.1} parent=5 // pred_region
        %s716 = ssub.s32 %s16, 2
      $region56: #{tpu_custom_call.1} parent=5 // pred_fallthru
        _
    $region6: #{tpu_custom_call.1} parent=1 // loop_footer
      %s20 = sadd.s32 1, %s16
    $region7: #{tpu_custom_call.1} parent=1 // loop_footer_branch
      %15 = sbr.rel target = $region3
    $region8: #{tpu_custom_call.1} parent=1 // loop_exit
      _
    %717 = vsyncpa [#allocation4], 1
    %s718 = scalar_lea.sflag [#allocation4], 1
    %719 = vsyncpa %s718, 1
    %720 = vsyncpa [#allocation5], 1
    %s721 = scalar_lea.sflag [#allocation5], 1
    %722 = vsyncpa %s721, 1
    %723 = vsyncpa [#allocation8], 1

</llo_original>
